<compile_context>
chip_gen: v6e
topology: v6e:2x2x1
jax: 0.10.0
libtpu: 0.0.40
codegen_flags: <defaults>
</compile_context>

<pallas_src>
import jax
import jax.numpy as jnp
from jax.experimental import pallas as pl
from jax.experimental.pallas import tpu as pltpu


def _round_up(n, m):
    return ((n + m - 1) // m) * m


def _leaky_relu(v, negative_slope=0.01):
    # slope < 1  =>  max(v, slope*v) == LeakyReLU(v); one vmul + vmax, no compare/select.
    return jnp.maximum(v, negative_slope * v)


def _j_discriminator_kernel(x_ref, w1_ref, b1_ref, w2_ref, b2_ref, w3_ref, b3_ref, o_ref):
    # x arrives in its HBM dtype (f32 here); cast to bf16 in-kernel for the MXU.
    x = x_ref[...].astype(jnp.bfloat16)

    # input layer + LeakyReLU (f32 accumulate, f32 epilogue)
    h = jnp.dot(x, w1_ref[...], preferred_element_type=jnp.float32) + b1_ref[...]
    h = _leaky_relu(h)

    # hidden layer + LeakyReLU
    h = jnp.dot(h.astype(jnp.bfloat16), w2_ref[...],
                preferred_element_type=jnp.float32) + b2_ref[...]
    h = _leaky_relu(h)

    # output layer + LeakyReLU (unpadded last dim; masked vst on the partial batch block)
    out = jnp.dot(h.astype(jnp.bfloat16), w3_ref[...],
                  preferred_element_type=jnp.float32) + b3_ref[...]
    o_ref[...] = _leaky_relu(out).astype(o_ref.dtype)


def j_discriminator_forward(x, params, *, batch_tile=512, out_dtype=jnp.float32):
    """x: (B, input_size). params: bf16 weights pre-transposed (in, out); f32 biases (1, out)."""
    w1, b1 = params["w1"], params["b1"]   # (in,  hid) bf16, (1, hid) f32
    w2, b2 = params["w2"], params["b2"]   # (hid, hid) bf16, (1, hid) f32
    w3, b3 = params["w3"], params["b3"]   # (hid, out) bf16, (1, out) f32

    B, in_size = x.shape
    hid = w1.shape[1]
    out_size = w3.shape[1]

    # --- batch tile: multiple of 16 (bf16-friendly), big enough to amortize per-step
    #     overhead, and split into >=2 grid steps for moderate batches (v7x megacore). ---
    tb_full = _round_up(B, 16)
    if B >= 32 and tb_full <= batch_tile:
        TB = max(16, _round_up(pl.cdiv(B, 2), 16))
    else:
        TB = min(batch_tile, tb_full)
    grid = (pl.cdiv(B, TB),)

    # weights / biases: constant index_map -> DMA'd once, resident in VMEM; single-buffered.
    def resident(a):
        return pl.BlockSpec(a.shape, lambda i: (0,) * a.ndim,
                            pipeline_mode=pl.Buffered(1))

    # --- VMEM budget (explicit; keeps the x/out double-buffering alive on v7x's 64 MiB) ---
    x_tile_bytes = TB * in_size * x.dtype.itemsize
    out_tile_bytes = TB * out_size * jnp.dtype(out_dtype).itemsize
    resident_bytes = ((w1.size + w2.size + w3.size) * 2
                      + (b1.size + b2.size + b3.size) * 4)
    needed = 2 * (x_tile_bytes + out_tile_bytes) + resident_bytes
    vmem_limit = int(min(64 << 20, max(16 << 20, 4 * needed)))

    flops = 2 * B * (in_size * hid + hid * hid + hid * out_size)
    bytes_accessed = (x.size * x.dtype.itemsize
                      + resident_bytes
                      + B * out_size * jnp.dtype(out_dtype).itemsize)

    return pl.pallas_call(
        _j_discriminator_kernel,
        out_shape=jax.ShapeDtypeStruct((B, out_size), out_dtype),
        grid_spec=pltpu.PrefetchScalarGridSpec(
            num_scalar_prefetch=0,
            grid=grid,
            in_specs=[
                pl.BlockSpec((TB, in_size), lambda i: (i, 0)),   # x: tiled along batch
                resident(w1), resident(b1),
                resident(w2), resident(b2),
                resident(w3), resident(b3),
            ],
            # full-extent last dim (== out_size) is legal; no 128-lane padding.
            out_specs=pl.BlockSpec((TB, out_size), lambda i: (i, 0)),
        ),
        compiler_params=pltpu.CompilerParams(
            dimension_semantics=("parallel",),                   # megacore on v7x
            vmem_limit_bytes=vmem_limit,
        ),
        cost_estimate=pl.CostEstimate(
            flops=flops, transcendentals=0, bytes_accessed=bytes_accessed),
    )(x, w1, b1, w2, b2, w3, b3)


def init_params(key, input_size, hidden_size, output_size):
    """Deterministic init mimicking nn.Linear U(-1/sqrt(fan_in), 1/sqrt(fan_in)).

    Weights are stored pre-transposed as (in, out) and pre-cast to bf16; biases (1, out) f32,
    so no per-forward cast/pad passes are needed.
    """
    k1, k2, k3, k4, k5, k6 = jax.random.split(key, 6)

    def lin(kw, kb, fan_in, fan_out):
        bound = 1.0 / jnp.sqrt(jnp.float32(fan_in))
        w = jax.random.uniform(kw, (fan_in, fan_out), jnp.float32, -bound, bound)
        b = jax.random.uniform(kb, (1, fan_out), jnp.float32, -bound, bound)
        return w.astype(jnp.bfloat16), b.astype(jnp.float32)

    w1, b1 = lin(k1, k2, input_size, hidden_size)
    w2, b2 = lin(k3, k4, hidden_size, hidden_size)
    w3, b3 = lin(k5, k6, hidden_size, output_size)
    return {"w1": w1, "b1": b1, "w2": w2, "b2": b2, "w3": w3, "b3": b3}


def reference_forward(x, params):
    """Pure-JAX reference using the same bf16-quantized matmul inputs + f32 accumulation."""
    # TODO(synk): bf16 quantization of x/activations deviates from a pure-f32 PyTorch forward
    # by more than final-rounding error; this reference matches the kernel's precision policy.
    q = lambda a: a.astype(jnp.bfloat16).astype(jnp.float32)
    lrelu = lambda v: jnp.maximum(v, 0.01 * v)
    h = lrelu(q(x) @ q(params["w1"]) + params["b1"])
    h = lrelu(q(h) @ q(params["w2"]) + params["b2"])
    return lrelu(q(h) @ q(params["w3"]) + params["b3"])


if __name__ == "__main__":
    key = jax.random.PRNGKey(0)
    kx, kp = jax.random.split(key)

    batch = 2
    input_size = 32     # e.g. latent z concat feature vector in mini BigBiGAN
    hidden_size = 32
    output_size = 8

    x = jax.random.normal(kx, (batch, input_size), jnp.float32)
    params = init_params(kp, input_size, hidden_size, output_size)

    out = j_discriminator_forward(x, params)
    out = jax.block_until_ready(out)

    ref = reference_forward(x, params)
    assert out.shape == (batch, output_size), out.shape
    assert jnp.allclose(out, ref, atol=1e-3, rtol=1e-3), "mismatch vs pure-JAX reference"

    print("KERNEL_OK")
</pallas_src>

<mosaic_0001>
module attributes {stable_mosaic.version = 11 : i64} {
  func.func @_j_discriminator_kernel(%arg0: i32, %arg1: memref<16x32xf32, #tpu.memory_space<vmem>>, %arg2: memref<32x32xbf16, #tpu.memory_space<vmem>>, %arg3: memref<1x32xf32, #tpu.memory_space<vmem>>, %arg4: memref<32x32xbf16, #tpu.memory_space<vmem>>, %arg5: memref<1x32xf32, #tpu.memory_space<vmem>>, %arg6: memref<32x8xbf16, #tpu.memory_space<vmem>>, %arg7: memref<1x8xf32, #tpu.memory_space<vmem>>, %arg8: memref<16x8xf32, #tpu.memory_space<vmem>>) attributes {dimension_semantics = [#tpu.dimension_semantics<parallel>], iteration_bounds = array<i64: 1>, scalar_prefetch = 0 : i64, scratch_operands = 0 : i64, tpu.core_type = #tpu.core_type<tc>, window_params = [{transform_indices = @transform_0, window_bounds = array<i64: 16, 32>}, {pipeline_mode = #tpu.pipeline_mode<synchronous>, transform_indices = @transform_1, window_bounds = array<i64: 32, 32>}, {pipeline_mode = #tpu.pipeline_mode<synchronous>, transform_indices = @transform_2, window_bounds = array<i64: 1, 32>}, {pipeline_mode = #tpu.pipeline_mode<synchronous>, transform_indices = @transform_3, window_bounds = array<i64: 32, 32>}, {pipeline_mode = #tpu.pipeline_mode<synchronous>, transform_indices = @transform_4, window_bounds = array<i64: 1, 32>}, {pipeline_mode = #tpu.pipeline_mode<synchronous>, transform_indices = @transform_5, window_bounds = array<i64: 32, 8>}, {pipeline_mode = #tpu.pipeline_mode<synchronous>, transform_indices = @transform_6, window_bounds = array<i64: 1, 8>}, {transform_indices = @transform_7, window_bounds = array<i64: 16, 8>}]} {
    %c0 = arith.constant 0 : index
    %c0_0 = arith.constant 0 : index
    %0 = vector.load %arg1[%c0, %c0_0] : memref<16x32xf32, #tpu.memory_space<vmem>>, vector<16x32xf32>
    %1 = arith.truncf %0 : vector<16x32xf32> to vector<16x32xbf16>
    %c0_1 = arith.constant 0 : index
    %c0_2 = arith.constant 0 : index
    %2 = vector.load %arg2[%c0_1, %c0_2] : memref<32x32xbf16, #tpu.memory_space<vmem>>, vector<32x32xbf16>
    %cst = arith.constant dense<0.000000e+00> : vector<16x32xf32>
    %3 = tpu.matmul %1, %2, %cst {dimension_numbers = #tpu.dot_dimension_numbers<[1], [0], [0], [1], [0, 0, 1, 1], [], []>} : vector<16x32xbf16>, vector<32x32xbf16>, vector<16x32xf32> -> vector<16x32xf32>
    %c0_3 = arith.constant 0 : index
    %c0_4 = arith.constant 0 : index
    %4 = vector.load %arg3[%c0_3, %c0_4] : memref<1x32xf32, #tpu.memory_space<vmem>>, vector<1x32xf32>
    %5 = vector.broadcast %4 : vector<1x32xf32> to vector<16x32xf32>
    %6 = arith.addf %3, %5 : vector<16x32xf32>
    %cst_5 = arith.constant 0.00999999977 : f32
    %7 = vector.broadcast %cst_5 : f32 to vector<16x32xf32>
    %8 = arith.mulf %7, %6 : vector<16x32xf32>
    %9 = arith.maximumf %6, %8 : vector<16x32xf32>
    %10 = arith.truncf %9 : vector<16x32xf32> to vector<16x32xbf16>
    %c0_6 = arith.constant 0 : index
    %c0_7 = arith.constant 0 : index
    %11 = vector.load %arg4[%c0_6, %c0_7] : memref<32x32xbf16, #tpu.memory_space<vmem>>, vector<32x32xbf16>
    %cst_8 = arith.constant dense<0.000000e+00> : vector<16x32xf32>
    %12 = tpu.matmul %10, %11, %cst_8 {dimension_numbers = #tpu.dot_dimension_numbers<[1], [0], [0], [1], [0, 0, 1, 1], [], []>} : vector<16x32xbf16>, vector<32x32xbf16>, vector<16x32xf32> -> vector<16x32xf32>
    %c0_9 = arith.constant 0 : index
    %c0_10 = arith.constant 0 : index
    %13 = vector.load %arg5[%c0_9, %c0_10] : memref<1x32xf32, #tpu.memory_space<vmem>>, vector<1x32xf32>
    %14 = vector.broadcast %13 : vector<1x32xf32> to vector<16x32xf32>
    %15 = arith.addf %12, %14 : vector<16x32xf32>
    %cst_11 = arith.constant 0.00999999977 : f32
    %16 = vector.broadcast %cst_11 : f32 to vector<16x32xf32>
    %17 = arith.mulf %16, %15 : vector<16x32xf32>
    %18 = arith.maximumf %15, %17 : vector<16x32xf32>
    %19 = arith.truncf %18 : vector<16x32xf32> to vector<16x32xbf16>
    %c0_12 = arith.constant 0 : index
    %c0_13 = arith.constant 0 : index
    %20 = vector.load %arg6[%c0_12, %c0_13] : memref<32x8xbf16, #tpu.memory_space<vmem>>, vector<32x8xbf16>
    %cst_14 = arith.constant dense<0.000000e+00> : vector<16x8xf32>
    %21 = tpu.matmul %19, %20, %cst_14 {dimension_numbers = #tpu.dot_dimension_numbers<[1], [0], [0], [1], [0, 0, 1, 1], [], []>} : vector<16x32xbf16>, vector<32x8xbf16>, vector<16x8xf32> -> vector<16x8xf32>
    %c0_15 = arith.constant 0 : index
    %c0_16 = arith.constant 0 : index
    %22 = vector.load %arg7[%c0_15, %c0_16] : memref<1x8xf32, #tpu.memory_space<vmem>>, vector<1x8xf32>
    %23 = vector.broadcast %22 : vector<1x8xf32> to vector<16x8xf32>
    %24 = arith.addf %21, %23 : vector<16x8xf32>
    %cst_17 = arith.constant 0.00999999977 : f32
    %25 = vector.broadcast %cst_17 : f32 to vector<16x8xf32>
    %26 = arith.mulf %25, %24 : vector<16x8xf32>
    %27 = arith.maximumf %24, %26 : vector<16x8xf32>
    %c0_18 = arith.constant 0 : index
    %c0_19 = arith.constant 0 : index
    %28 = vector.load %arg8[%c0_18, %c0_19] : memref<16x8xf32, #tpu.memory_space<vmem>>, vector<16x8xf32>
    tpu.vector_store %arg8[%c0_18, %c0_19], %27 {strides = array<i32>} : memref<16x8xf32, #tpu.memory_space<vmem>>, vector<16x8xf32>,
    return
  }
  func.func @transform_0(%arg0: i32) -> (i32, i32) {
    %c0_i32 = arith.constant 0 : i32
    %c0_i32_0 = arith.constant 0 : i32
    return %arg0, %c0_i32 : i32, i32
  }
  func.func @transform_1(%arg0: i32) -> (i32, i32) {
    %c0_i32 = arith.constant 0 : i32
    %c0_i32_0 = arith.constant 0 : i32
    %c0_i32_1 = arith.constant 0 : i32
    return %c0_i32, %c0_i32_0 : i32, i32
  }
  func.func @transform_2(%arg0: i32) -> (i32, i32) {
    %c0_i32 = arith.constant 0 : i32
    %c0_i32_0 = arith.constant 0 : i32
    %c0_i32_1 = arith.constant 0 : i32
    return %c0_i32, %c0_i32_0 : i32, i32
  }
  func.func @transform_3(%arg0: i32) -> (i32, i32) {
    %c0_i32 = arith.constant 0 : i32
    %c0_i32_0 = arith.constant 0 : i32
    %c0_i32_1 = arith.constant 0 : i32
    return %c0_i32, %c0_i32_0 : i32, i32
  }
  func.func @transform_4(%arg0: i32) -> (i32, i32) {
    %c0_i32 = arith.constant 0 : i32
    %c0_i32_0 = arith.constant 0 : i32
    %c0_i32_1 = arith.constant 0 : i32
    return %c0_i32, %c0_i32_0 : i32, i32
  }
  func.func @transform_5(%arg0: i32) -> (i32, i32) {
    %c0_i32 = arith.constant 0 : i32
    %c0_i32_0 = arith.constant 0 : i32
    %c0_i32_1 = arith.constant 0 : i32
    return %c0_i32, %c0_i32_0 : i32, i32
  }
  func.func @transform_6(%arg0: i32) -> (i32, i32) {
    %c0_i32 = arith.constant 0 : i32
    %c0_i32_0 = arith.constant 0 : i32
    %c0_i32_1 = arith.constant 0 : i32
    return %c0_i32, %c0_i32_0 : i32, i32
  }
  func.func @transform_7(%arg0: i32) -> (i32, i32) {
    %c0_i32 = arith.constant 0 : i32
    %c0_i32_0 = arith.constant 0 : i32
    return %arg0, %c0_i32 : i32, i32
  }
}

</mosaic_0001>

<llo_original>
// kernel: tpu_custom_call.1
$region0: #{tpu_custom_call.1}
  #allocation0 [shape = 'u32[]', space=smem, size = 0x4, offset = 0x4, fixed_abs, tag = 'smem constant byte address 0x4 - core index']
  #allocation1 [shape = 'u32[144,128]{1,0:T(1,128)}', space=vmem, size = 0x12000, scoped, tag = 'internal scratch']
  %s0 = inlined_call_operand.vmem [shape: f32[2,32], index: 0, kind: input, shape index: {}]
  %s1 = inlined_call_operand.vmem [shape: bf16[32,32], index: 1, kind: input, shape index: {}]
  %s2 = inlined_call_operand.vmem [shape: f32[1,32], index: 2, kind: input, shape index: {}]
  %s3 = inlined_call_operand.hbm [shape: bf16[32,32], index: 3, kind: input, shape index: {}]
  %s4 = inlined_call_operand.vmem [shape: f32[1,32], index: 4, kind: input, shape index: {}]
  %s5 = inlined_call_operand.vmem [shape: bf16[32,8], index: 5, kind: input, shape index: {}]
  %s6 = inlined_call_operand.vmem [shape: f32[1,8], index: 6, kind: input, shape index: {}]
  %s7 = inlined_call_operand.hbm [shape: f32[2,8], index: 7, kind: output, shape index: {}]
  %s8 = sld [smem:[#allocation0]]
  $region42: #{tpu_custom_call.1} parent=0
    _
  %s10 = ssub.s32 1, %s8
  %s11 = scalar_select 0, %s10, %s8
  $region1: #{tpu_custom_call.1} parent=0
    #allocation2 [shape = 'u8[8192]{0}', space=vmem, size = 0x2000, scoped, tag = 'input window, operand 3, single buffered']
    #allocation3 [shape = 's32[1]{0}', space=sflag, size = 0x4, scoped, tag = 'scoped memory for tpu_custom_call.1']
    #allocation4 [shape = 's32[1]{0}', space=sflag, size = 0x4, scoped, tag = 'scoped memory for tpu_custom_call.1']
    #allocation5 [shape = 'u8[8192]{0}', space=vmem, size = 0x2000, scoped, tag = 'output window, operand 0, single buffered']
    %12 = vsyncpa [#allocation3], 0
    %13 = vsyncpa [#allocation4], 0
    // Predicated region
    $region2: #{tpu_custom_call.1} parent=1 // pred_check
      _
    $region3: #{tpu_custom_call.1} parent=1 // pred_check_branch
      %15 = sbr.rel (0) target = $region5
    $region4: #{tpu_custom_call.1} parent=1 // pred_region
      _
    $region5: #{tpu_custom_call.1} parent=1 // pred_fallthru
      _
    // Predicated region
    $region6: #{tpu_custom_call.1} parent=1 // pred_check
      _
    $region7: #{tpu_custom_call.1} parent=1 // pred_check_branch
      %17 = sbr.rel (0) target = $region9
    $region8: #{tpu_custom_call.1} parent=1 // pred_region
      _
    $region9: #{tpu_custom_call.1} parent=1 // pred_fallthru
      _
    // Predicated region
    $region10: #{tpu_custom_call.1} parent=1 // pred_check
      _
    $region11: #{tpu_custom_call.1} parent=1 // pred_check_branch
      %19 = sbr.rel (0) target = $region13
    $region12: #{tpu_custom_call.1} parent=1 // pred_region
      _
    $region13: #{tpu_custom_call.1} parent=1 // pred_fallthru
      _
    // Predicated region
    $region14: #{tpu_custom_call.1} parent=1 // pred_check
      _
    $region15: #{tpu_custom_call.1} parent=1 // pred_check_branch
      %21 = sbr.rel (0) target = $region17
    $region16: #{tpu_custom_call.1} parent=1 // pred_region
      %s23 = ssub.s32 256, 256
      %24 = vsyncadd [#allocation3], %s23
      %s25 = sshll.u32 [#allocation2], 4
      %s26 = int_to_ptr.vmem [resolvable:$true] %s25
      %31 = dma.hbm_to_vmem [thread:$0]  %s3, 256, %s26, [#allocation3], 64, 64, 4
    $region17: #{tpu_custom_call.1} parent=1 // pred_fallthru
      _
    // Predicated region
    $region18: #{tpu_custom_call.1} parent=1 // pred_check
      _
    $region19: #{tpu_custom_call.1} parent=1 // pred_check_branch
      %33 = sbr.rel (0) target = $region21
    $region20: #{tpu_custom_call.1} parent=1 // pred_region
      _
    $region21: #{tpu_custom_call.1} parent=1 // pred_fallthru
      _
    // Predicated region
    $region22: #{tpu_custom_call.1} parent=1 // pred_check
      _
    $region23: #{tpu_custom_call.1} parent=1 // pred_check_branch
      %35 = sbr.rel (0) target = $region25
    $region24: #{tpu_custom_call.1} parent=1 // pred_region
      _
    $region25: #{tpu_custom_call.1} parent=1 // pred_fallthru
      _
    // Predicated region
    $region26: #{tpu_custom_call.1} parent=1 // pred_check
      _
    $region27: #{tpu_custom_call.1} parent=1 // pred_check_branch
      %37 = sbr.rel (0) target = $region29
    $region28: #{tpu_custom_call.1} parent=1 // pred_region
      _
    $region29: #{tpu_custom_call.1} parent=1 // pred_fallthru
      _
    // Predicated region
    $region30: #{tpu_custom_call.1} parent=1 // pred_check
      _
    $region31: #{tpu_custom_call.1} parent=1 // pred_check_branch
      %39 = sbr.rel (0) target = $region33
    $region32: #{tpu_custom_call.1} parent=1 // pred_region
      %40 = dma.done [#allocation3], 256
    $region33: #{tpu_custom_call.1} parent=1 // pred_fallthru
      _
    %v42 = vld [vmem:[%s0] sm:$0xff]
    %v43 = vld [vmem:[%s0 + $0x8] sm:$0xff]
    %v44 = vpack.c.bf16 %v43, %v42
    %v45 = vld [vmem:[%s1] sm:$0xf]
    %v46 = vld [vmem:[%s1 + $0x4] sm:$0xf]
    %v47 = vld [vmem:[%s1 + $0x8] sm:$0xf]
    %v48 = vld [vmem:[%s1 + $0xc] sm:$0xf]
    %v49 = vld [vmem:[%s2] sm:$0x1]
    %v51 = vlaneseq
    %v52 = vshrl.u32 %v51, 7
    %v53 = vsub.s32 0, %v52
    %v54 = vrot.slane %v49, %v53
    %v60 = vunpack.c.l.b16 %v45
    %v61 = vunpack.c.l.b16 %v46
    %v62 = vunpack.c.l.b16 %v47
    %v63 = vunpack.c.l.b16 %v48
    %v64 = vpack.c.b16 %v61, %v60
    %v65 = vpack.c.b16 %v63, %v62
    %vm68 = vcmask 261120
    %v70 = vsel %vm68, %v44, 0
    %72 = vmatprep.subr.bf16.mxu0 0
    %73 = vmatpush1.bf16.msra.mxu0 0
    %74 = vmatprep.subr.bf16.mxu0 0
    %75 = vmatpush1.bf16.msra.mxu0 0
    %76 = vmatprep.subr.bf16.mxu0 0
    %77 = vmatpush1.bf16.msra.mxu0 0
    %78 = vmatprep.subr.bf16.mxu0 0
    %79 = vmatpush1.bf16.msra.mxu0 0
    %80 = vmatprep.subr.bf16.mxu0 0
    %81 = vmatpush1.bf16.msra.mxu0 0
    %82 = vmatprep.subr.bf16.mxu0 0
    %83 = vmatpush1.bf16.msra.mxu0 0
    %84 = vmatprep.subr.bf16.mxu0 0
    %85 = vmatpush1.bf16.msra.mxu0 %v65
    %86 = vmatprep.subr.bf16.mxu0 0
    %87 = vmatpush1.bf16.msra.mxu0 %v64
    %88 = vmatprep.subr.bf16.mxu0 0
    %89 = vmatpush2.bf16.msra.mxu0 0
    %90 = vmatprep.subr.bf16.mxu0 0
    %91 = vmatpush2.bf16.msra.mxu0 0
    %92 = vmatprep.subr.bf16.mxu0 0
    %93 = vmatpush2.bf16.msra.mxu0 0
    %94 = vmatprep.subr.bf16.mxu0 0
    %95 = vmatpush2.bf16.msra.mxu0 0
    %96 = vmatprep.subr.bf16.mxu0 0
    %97 = vmatpush2.bf16.msra.mxu0 0
    %98 = vmatprep.subr.bf16.mxu0 0
    %99 = vmatpush2.bf16.msra.mxu0 0
    %100 = vmatprep.subr.bf16.mxu0 0
    %101 = vmatpush2.bf16.msra.mxu0 0
    %102 = vmatprep.subr.bf16.mxu0 0
    %103 = vmatpush2.bf16.msra.mxu0 0
    %104 = vmatprep.mubr.bf16.mxu0 0
    %105 = vmatmul.mubr.bf16.gmra.mxu0 %v70
    %v106 = vpop.f32.mrf.mxu0
    %v107 = vadd.f32 %v54, %v106
    %v108 = vpop.f32.mrf.mxu0
    %v109 = vpop.f32.mrf.mxu0
    %v110 = vadd.f32 %v54, %v109
    %v111 = vpop.f32.mrf.mxu0
    %112 = vdwg.mxu0
    %v113 = vmul.f32 %v107, 0.01
    %v114 = vmul.f32 %v110, 0.01
    %v115 = vmax.f32 %v107, %v113
    %v116 = vmax.f32 %v110, %v114
    %v117 = vpack.c.bf16 %v116, %v115
    %v118 = vld [vmem:[#allocation2] sm:$0xf]
    %v119 = vld [vmem:[#allocation2 + $0x4] sm:$0xf]
    %v120 = vld [vmem:[#allocation2 + $0x8] sm:$0xf]
    %v121 = vld [vmem:[#allocation2 + $0xc] sm:$0xf]
    %v122 = vld [vmem:[%s4] sm:$0x1]
    %v124 = vlaneseq
    %v125 = vshrl.u32 %v124, 7
    %v126 = vsub.s32 0, %v125
    %v127 = vrot.slane %v122, %v126
    %v133 = vunpack.c.l.b16 %v118
    %v134 = vunpack.c.l.b16 %v119
    %v135 = vunpack.c.l.b16 %v120
    %v136 = vunpack.c.l.b16 %v121
    %v137 = vpack.c.b16 %v134, %v133
    %v138 = vpack.c.b16 %v136, %v135
    %v142 = vsel %vm68, %v117, 0
    %144 = vmatprep.subr.bf16.mxu0 0
    %145 = vmatpush1.bf16.msra.mxu0 0
    %146 = vmatprep.subr.bf16.mxu0 0
    %147 = vmatpush1.bf16.msra.mxu0 0
    %148 = vmatprep.subr.bf16.mxu0 0
    %149 = vmatpush1.bf16.msra.mxu0 0
    %150 = vmatprep.subr.bf16.mxu0 0
    %151 = vmatpush1.bf16.msra.mxu0 0
    %152 = vmatprep.subr.bf16.mxu0 0
    %153 = vmatpush1.bf16.msra.mxu0 0
    %154 = vmatprep.subr.bf16.mxu0 0
    %155 = vmatpush1.bf16.msra.mxu0 0
    %156 = vmatprep.subr.bf16.mxu0 0
    %157 = vmatpush1.bf16.msra.mxu0 %v138
    %158 = vmatprep.subr.bf16.mxu0 0
    %159 = vmatpush1.bf16.msra.mxu0 %v137
    %160 = vmatprep.subr.bf16.mxu0 0
    %161 = vmatpush2.bf16.msra.mxu0 0
    %162 = vmatprep.subr.bf16.mxu0 0
    %163 = vmatpush2.bf16.msra.mxu0 0
    %164 = vmatprep.subr.bf16.mxu0 0
    %165 = vmatpush2.bf16.msra.mxu0 0
    %166 = vmatprep.subr.bf16.mxu0 0
    %167 = vmatpush2.bf16.msra.mxu0 0
    %168 = vmatprep.subr.bf16.mxu0 0
    %169 = vmatpush2.bf16.msra.mxu0 0
    %170 = vmatprep.subr.bf16.mxu0 0
    %171 = vmatpush2.bf16.msra.mxu0 0
    %172 = vmatprep.subr.bf16.mxu0 0
    %173 = vmatpush2.bf16.msra.mxu0 0
    %174 = vmatprep.subr.bf16.mxu0 0
    %175 = vmatpush2.bf16.msra.mxu0 0
    %176 = vmatprep.mubr.bf16.mxu0 0
    %177 = vmatmul.mubr.bf16.gmra.mxu0 %v142
    %v178 = vpop.f32.mrf.mxu0
    %v179 = vadd.f32 %v127, %v178
    %v180 = vpop.f32.mrf.mxu0
    %v181 = vpop.f32.mrf.mxu0
    %v182 = vadd.f32 %v127, %v181
    %v183 = vpop.f32.mrf.mxu0
    %184 = vdwg.mxu0
    %v185 = vmul.f32 %v179, 0.01
    %v186 = vmul.f32 %v182, 0.01
    %v187 = vmax.f32 %v179, %v185
    %v188 = vmax.f32 %v182, %v186
    %v189 = vpack.c.bf16 %v188, %v187
    %v190 = vld [vmem:[%s5] sm:$0xf]
    %v191 = vld [vmem:[%s5 + $0x4] sm:$0xf]
    %v192 = vld [vmem:[%s5 + $0x8] sm:$0xf]
    %v193 = vld [vmem:[%s5 + $0xc] sm:$0xf]
    %v194 = vld [vmem:[%s6] sm:$0x1]
    %v196 = vlaneseq
    %v197 = vshrl.u32 %v196, 7
    %v198 = vsub.s32 0, %v197
    %v199 = vrot.slane %v194, %v198
    %v205 = vunpack.c.l.b16 %v190
    %v206 = vunpack.c.l.b16 %v191
    %v207 = vunpack.c.l.b16 %v192
    %v208 = vunpack.c.l.b16 %v193
    %v209 = vpack.c.b16 %v206, %v205
    %v210 = vpack.c.b16 %v208, %v207
    %v214 = vsel %vm68, %v189, 0
    %216 = vmatprep.subr.bf16.mxu0 0
    %217 = vmatpush1.bf16.msra.mxu0 0
    %218 = vmatprep.subr.bf16.mxu0 0
    %219 = vmatpush1.bf16.msra.mxu0 0
    %220 = vmatprep.subr.bf16.mxu0 0
    %221 = vmatpush1.bf16.msra.mxu0 0
    %222 = vmatprep.subr.bf16.mxu0 0
    %223 = vmatpush1.bf16.msra.mxu0 0
    %224 = vmatprep.subr.bf16.mxu0 0
    %225 = vmatpush1.bf16.msra.mxu0 0
    %226 = vmatprep.subr.bf16.mxu0 0
    %227 = vmatpush1.bf16.msra.mxu0 0
    %228 = vmatprep.subr.bf16.mxu0 0
    %229 = vmatpush1.bf16.msra.mxu0 %v210
    %230 = vmatprep.subr.bf16.mxu0 0
    %231 = vmatpush1.bf16.msra.mxu0 %v209
    %232 = vmatprep.subr.bf16.mxu0 0
    %233 = vmatpush2.bf16.msra.mxu0 0
    %234 = vmatprep.subr.bf16.mxu0 0
    %235 = vmatpush2.bf16.msra.mxu0 0
    %236 = vmatprep.subr.bf16.mxu0 0
    %237 = vmatpush2.bf16.msra.mxu0 0
    %238 = vmatprep.subr.bf16.mxu0 0
    %239 = vmatpush2.bf16.msra.mxu0 0
    %240 = vmatprep.subr.bf16.mxu0 0
    %241 = vmatpush2.bf16.msra.mxu0 0
    %242 = vmatprep.subr.bf16.mxu0 0
    %243 = vmatpush2.bf16.msra.mxu0 0
    %244 = vmatprep.subr.bf16.mxu0 0
    %245 = vmatpush2.bf16.msra.mxu0 0
    %246 = vmatprep.subr.bf16.mxu0 0
    %247 = vmatpush2.bf16.msra.mxu0 0
    %248 = vmatprep.mubr.bf16.mxu0 0
    %249 = vmatmul.mubr.bf16.gmra.mxu0 %v214
    %v250 = vpop.f32.mrf.mxu0
    %v251 = vadd.f32 %v199, %v250
    %v252 = vpop.f32.mrf.mxu0
    %v253 = vpop.f32.mrf.mxu0
    %v254 = vadd.f32 %v199, %v253
    %v255 = vpop.f32.mrf.mxu0
    %256 = vdwg.mxu0
    %v257 = vmul.f32 %v251, 0.01
    %v258 = vmul.f32 %v254, 0.01
    %v259 = vmax.f32 %v251, %v257
    %v260 = vmax.f32 %v254, %v258
    %vm261 = vcmask 64512
    %262 = vst.msk [vmem:[#allocation5] sm:$0xff] %vm261, %v259
    %263 = vst.msk [vmem:[#allocation5 + $0x8] sm:$0xff] %vm261, %v260
    // Predicated region
    $region34: #{tpu_custom_call.1} parent=1 // pred_check
      _
    $region35: #{tpu_custom_call.1} parent=1 // pred_check_branch
      %265 = sbr.rel (0) target = $region37
    $region36: #{tpu_custom_call.1} parent=1 // pred_region
      %s267 = ssub.s32 256, 32
      %268 = vsyncadd [#allocation4], %s267
      %s269 = sshll.u32 [#allocation5], 4
      %s270 = int_to_ptr.vmem [resolvable:$true] %s269
      %275 = dma.vmem_to_hbm [thread:$0]  %s270, 32, %s7, [#allocation4], 32, 32, 2
    $region37: #{tpu_custom_call.1} parent=1 // pred_fallthru
      _
    // Predicated region
    $region38: #{tpu_custom_call.1} parent=1 // pred_check
      _
    $region39: #{tpu_custom_call.1} parent=1 // pred_check_branch
      %277 = sbr.rel (0) target = $region41
    $region40: #{tpu_custom_call.1} parent=1 // pred_region
      %278 = dma.done [#allocation4], 256
    $region41: #{tpu_custom_call.1} parent=1 // pred_fallthru
      _
    %279 = vsyncpa [#allocation3], 1
    %280 = vsyncpa [#allocation4], 1

</llo_original>
